<compile_context>
chip_gen: v7x
topology: tpu7x:2x2x1
jax: 0.10.0
libtpu: 0.0.40
codegen_flags: <defaults>
</compile_context>

<pallas_src>
import functools
import math

import numpy as np
import jax
import jax.numpy as jnp
from jax.experimental import pallas as pl
from jax.experimental.pallas import tpu as pltpu


# -----------------------------------------------------------------------------
# Deterministic constant construction (mel basis, Hann window, CheapTrick tables)
# -----------------------------------------------------------------------------
def _hz_to_mel(freqs):
    freqs = np.asarray(freqs, dtype=np.float64)
    f_sp = 200.0 / 3.0
    mels = freqs / f_sp
    min_log_hz = 1000.0
    min_log_mel = min_log_hz / f_sp
    logstep = np.log(6.4) / 27.0
    return np.where(
        freqs >= min_log_hz,
        min_log_mel + np.log(np.maximum(freqs, 1e-10) / min_log_hz) / logstep,
        mels,
    )


def _mel_to_hz(mels):
    mels = np.asarray(mels, dtype=np.float64)
    f_sp = 200.0 / 3.0
    freqs = f_sp * mels
    min_log_hz = 1000.0
    min_log_mel = min_log_hz / f_sp
    logstep = np.log(6.4) / 27.0
    return np.where(
        mels >= min_log_mel,
        min_log_hz * np.exp(logstep * (mels - min_log_mel)),
        freqs,
    )


def librosa_mel(sr, n_fft, n_mels, fmin, fmax):
    """librosa.filters.mel (slaney mel scale, slaney norm). Returns (n_mels, n_fft//2+1)."""
    n_freqs = n_fft // 2 + 1
    fftfreqs = np.linspace(0.0, sr / 2.0, n_freqs)
    mel_pts = np.linspace(_hz_to_mel(fmin), _hz_to_mel(fmax), n_mels + 2)
    mel_f = _mel_to_hz(mel_pts)
    fdiff = np.diff(mel_f)
    ramps = mel_f[:, None] - fftfreqs[None, :]
    weights = np.zeros((n_mels, n_freqs), dtype=np.float64)
    for i in range(n_mels):
        lower = -ramps[i] / fdiff[i]
        upper = ramps[i + 2] / fdiff[i + 1]
        weights[i] = np.maximum(0.0, np.minimum(lower, upper))
    enorm = 2.0 / (mel_f[2 : n_mels + 2] - mel_f[:n_mels])
    weights *= enorm[:, None]
    return weights.astype(np.float32)


def hann_window(win_length):
    """torch.hann_window (periodic=True)."""
    n = np.arange(win_length)
    return (0.5 - 0.5 * np.cos(2.0 * np.pi * n / win_length)).astype(np.float32)


def cheaptrick_tables(sample_rate, fft_size, f0_floor, f0_ceil, q1=-0.15):
    """Precompute CheapTrick adaptive windows and lifters, indexed by integer F0."""
    K = fft_size // 2 + 1
    win_tab = np.zeros((f0_ceil + 1, fft_size), dtype=np.float32)
    sm_tab = np.zeros((f0_ceil + 1, K), dtype=np.float32)
    cp_tab = np.zeros((f0_ceil + 1, K), dtype=np.float32)
    q0 = 1.0 - 2.0 * q1
    quef = np.arange(1, K, dtype=np.float64) / sample_rate
    for f0 in range(f0_floor, f0_ceil + 1):
        half = int(round(1.5 * sample_rate / f0))
        base = np.arange(-half, half + 1, dtype=np.float64)
        position = base / 1.5 / sample_rate
        w = np.zeros(fft_size, dtype=np.float64)
        left = fft_size // 2 - half
        right = fft_size // 2 + half + 1
        w[left:right] = 0.5 * np.cos(math.pi * position * f0) + 0.5
        w = w / np.sqrt(np.sum(w * w))
        win_tab[f0] = w.astype(np.float32)

        sm = np.zeros(K, dtype=np.float64)
        cp = np.zeros(K, dtype=np.float64)
        sm[0] = 1.0
        sm[1:] = np.sin(math.pi * f0 * quef) / (math.pi * f0 * quef)
        cp[0] = q0 + 2.0 * q1
        cp[1:] = q0 + 2.0 * q1 * np.cos(2.0 * math.pi * f0 * quef)
        sm_tab[f0] = sm.astype(np.float32)
        cp_tab[f0] = cp.astype(np.float32)
    return win_tab, sm_tab, cp_tab


# -----------------------------------------------------------------------------
# Plain-JAX glue: STFT and CheapTrick (need FFT — no Pallas equivalent)
# -----------------------------------------------------------------------------
def stft_spec(x, fft_size, hop_size, win_length, window, power=False,
              n_frames=None, out_dtype=jnp.float32):
    """Matches sifigan.losses.stft: (B, T) -> (B, n_frames, fft_size//2+1).

    The cast to `out_dtype` fuses with the magnitude epilogue so no extra HBM
    read+write pass is introduced; `n_frames` lets the caller request exactly
    `minlen` frames so no slice copy is needed afterwards.
    """
    del win_length  # == fft_size here
    pad = fft_size // 2
    xp = jnp.pad(x, ((0, 0), (pad, pad)), mode="reflect")
    max_frames = 1 + (xp.shape[1] - fft_size) // hop_size
    if n_frames is None:
        n_frames = max_frames
    n_frames = min(int(n_frames), int(max_frames))
    idx = jnp.arange(n_frames)[:, None] * hop_size + jnp.arange(fft_size)[None, :]
    frames = xp[:, idx] * window[None, None, :]
    spec = jnp.fft.rfft(frames)
    p = jnp.maximum(spec.real ** 2 + spec.imag ** 2, 1e-7)
    out = p if power else jnp.sqrt(p)
    return out.astype(out_dtype)


def cheaptrick(
    x,
    f,
    *,
    sample_rate,
    hop_size,
    fft_size,
    f0_floor,
    f0_ceil,
    window_table,
    smoothing_lifter,
    compensation_lifter,
    uv_threshold=0.0,
    power=False,
    elim_0th=True,
):
    """CheapTrick log spectral envelope: (B, T), (B, N) -> (B, N, fft_size//2+1)."""
    voiced = (f > uv_threshold).astype(f.dtype)
    f = voiced * f + (1.0 - voiced) * float(f0_ceil)
    f_idx = jnp.round(jnp.clip(f, float(f0_floor), float(f0_ceil))).astype(jnp.int32)

    pad = fft_size // 2
    xp = jnp.pad(x, ((0, 0), (pad, pad)))
    n_frames = f_idx.shape[1]
    idx = jnp.arange(n_frames)[:, None] * hop_size + jnp.arange(fft_size)[None, :]
    frames = xp[:, idx]                                  # (B, N, fft)
    windows = window_table[f_idx]                        # (B, N, fft)
    power_spec = jnp.abs(jnp.fft.rfft(frames * windows)) ** 2  # (B, N, K)

    sm = smoothing_lifter[f_idx]                         # (B, N, K)
    cp = compensation_lifter[f_idx]                      # (B, N, K)
    full = jnp.concatenate(
        [power_spec, jnp.flip(power_spec[:, :, 1:-1], axis=2)], axis=2
    )
    log_x = jnp.log(jnp.maximum(full, 1e-7))
    cepstrum = jnp.fft.rfft(log_x).real                  # (B, N, K)
    if elim_0th:
        cepstrum = cepstrum.at[..., 0].set(0.0)
    liftered = cepstrum * sm * cp
    env = jnp.fft.irfft(liftered, n=fft_size)[:, :, : fft_size // 2 + 1]
    if not power:
        env = env / 2.0
    return env


# -----------------------------------------------------------------------------
# Pallas kernel: the hot path, tiled over frames
#   per-frame means, residual spectrum t = y*exp(-e), fused mel matmul,
#   masked L1 partial sums
# -----------------------------------------------------------------------------
def _residual_loss_kernel(
    y_ref, e_ref, s_ref, mel_ref, out_ref, *,
    elim_0th, inv_k, n_valid_rows, tile_f, fuse_dots
):
    i = pl.program_id(0)

    y = y_ref[...].astype(jnp.float32)   # (TILE_F, K) |STFT(y)|   (bf16 in HBM)
    e = e_ref[...]                       # (TILE_F, K) log envelope (f32 in HBM)
    s = s_ref[...]                       # (TILE_F, K) |STFT(s)|   (bf16, MXU operand)
    mel = mel_ref[...]                   # (K, M_pad)  mel basis   (bf16, resident)

    # Residual spectrum.  t = y * exp(-e) == exp(log(clamp(y, 1e-7)) - e):
    # the clamp is a no-op because stft_spec clamps the power spectrum at 1e-7.
    # Elementwise math stays f32 (v5e has no bf16 VPU/EUP datapath).
    t = y * jnp.exp(-e)

    if elim_0th:
        # Means over the real K bins (block last dim == K, no padded columns).
        y_mean = jnp.sum(y, axis=-1, keepdims=True) * inv_k
        t_mean = jnp.sum(t, axis=-1, keepdims=True) * inv_k
        t = (y_mean * pl.reciprocal(t_mean, approx=True)) * t

    # MXU: bf16 operands, f32 accumulation.  Fused single dot amortizes the
    # mel RHS weight-push across both branches when TILE_F is vreg-aligned.
    t_b = t.astype(jnp.bfloat16)
    if fuse_dots:
        ts = jnp.concatenate([t_b, s], axis=0)           # (2*TILE_F, K) bf16
        lm = jnp.log(jnp.maximum(
            jnp.dot(ts, mel, preferred_element_type=jnp.float32), 1e-7))
        t_mel = lm[:tile_f]
        s_mel = lm[tile_f:]
    else:
        t_mel = jnp.log(jnp.maximum(
            jnp.dot(t_b, mel, preferred_element_type=jnp.float32), 1e-7))
        s_mel = jnp.log(jnp.maximum(
            jnp.dot(s, mel, preferred_element_type=jnp.float32), 1e-7))

    abs_diff = jnp.abs(s_mel - t_mel)    # (TILE_F, M_pad); zero mel cols -> 0

    last = pl.num_programs(0) - 1

    # Only the last tile can contain out-of-bounds (undefined) frame rows:
    # gate the iota + compare + select there; all other tiles just reduce.
    @pl.when(i < last)
    def _():
        out_ref[...] = jnp.sum(abs_diff, axis=0, keepdims=True)

    @pl.when(i == last)
    def _():
        row = jax.lax.broadcasted_iota(jnp.int32, abs_diff.shape, 0) + i * tile_f
        masked = jnp.where(row < n_valid_rows, abs_diff, 0.0)
        out_ref[...] = jnp.sum(masked, axis=0, keepdims=True)


def _round_up(x, m):
    return ((x + m - 1) // m) * m


def _vmem_bytes_estimate(tile_f, k_lanes, m_pad, fuse_dots):
    """Conservative per-step VMEM working-set estimate (bytes)."""
    in_bufs = 2 * tile_f * k_lanes * (2 + 4 + 2)   # y bf16 + e f32 + s bf16, double-buffered
    mel_buf = 2 * k_lanes * m_pad * 2              # resident mel (bf16), double-buffered
    out_buf = 2 * m_pad * 4
    temps = tile_f * k_lanes * (4 + 4 + 4 + 2)     # y_f32, exp(-e), t, t_bf16
    if fuse_dots:
        temps += 2 * tile_f * k_lanes * 2          # concatenated (2*TILE_F, K) bf16
    temps += 4 * 2 * tile_f * m_pad * 4            # dot result, logs, abs_diff
    return in_bufs + mel_buf + out_buf + temps


def residual_loss_pallas(y_spec, e, s_spec, melmat_padded, n_mels, elim_0th):
    """y_spec/s_spec: (B, N, K) bf16; e: (B, N, K) f32; melmat_padded: (K, M_pad) bf16."""
    B, N, K = y_spec.shape
    M_pad = melmat_padded.shape[1]
    F = B * N

    # Free reshapes (contiguous) — no HBM pad/cast pass.
    y2 = y_spec.reshape(F, K)
    e2 = e.reshape(F, K)
    s2 = s_spec.reshape(F, K)

    # Per-generation tile-size selection from VMEM capacity (1024 on v5e/v6e,
    # 512 on v7x for the 2048-point-FFT config).
    vmem_cap = 64 * 1024 * 1024
    try:
        vmem_cap = int(pltpu.get_tpu_info().vmem_capacity_bytes)
    except Exception:
        pass
    k_lanes = _round_up(K, 128)
    budget = int(0.55 * vmem_cap)
    tile_f = 8
    for cand in (1024, 512, 256, 128, 64, 32, 16, 8):
        if _vmem_bytes_estimate(cand, k_lanes, M_pad, True) <= budget:
            tile_f = cand
            break
    tile_f = min(tile_f, _round_up(F, 8))
    num_tiles = pl.cdiv(F, tile_f)
    # Fused dot needs the concat offset aligned to the bf16 sublane tile (16).
    fuse_dots = (tile_f % 16 == 0)

    kernel = functools.partial(
        _residual_loss_kernel,
        elim_0th=elim_0th,
        inv_k=1.0 / float(K),
        n_valid_rows=F,
        tile_f=tile_f,
        fuse_dots=fuse_dots,
    )

    cost = pl.CostEstimate(
        flops=2 * 2 * F * K * M_pad,
        transcendentals=F * K + 2 * F * M_pad + F,
        bytes_accessed=F * K * (2 + 4 + 2) + K * M_pad * 2 + num_tiles * M_pad * 4,
    )

    est = _vmem_bytes_estimate(tile_f, k_lanes, M_pad, fuse_dots)
    vmem_limit = int(
        min(max(est + 4 * 1024 * 1024, 16 * 1024 * 1024), int(0.9 * vmem_cap))
    )

    partials = pl.pallas_call(
        kernel,
        out_shape=jax.ShapeDtypeStruct((num_tiles, 1, M_pad), jnp.float32),
        grid=(num_tiles,),
        in_specs=[
            # Block last dim == full K (legal) -> no K padding materialized in HBM.
            pl.BlockSpec((tile_f, K), lambda i: (i, 0)),
            pl.BlockSpec((tile_f, K), lambda i: (i, 0)),
            pl.BlockSpec((tile_f, K), lambda i: (i, 0)),
            pl.BlockSpec((K, M_pad), lambda i: (0, 0)),   # resident mel basis
        ],
        out_specs=pl.BlockSpec((None, 1, M_pad), lambda i: (i, 0, 0)),
        compiler_params=pltpu.CompilerParams(
            dimension_semantics=("parallel",),
            vmem_limit_bytes=vmem_limit,
        ),
        cost_estimate=cost,
    )(y2, e2, s2, melmat_padded)

    # Mean over the real (F, n_mels) elements only (mask/zero mel cols handled the rest).
    return jnp.sum(partials) * (1.0 / float(F * n_mels))


# -----------------------------------------------------------------------------
# Module wrapper (mirrors ResidualLoss.__init__ / forward)
# -----------------------------------------------------------------------------
class ResidualLossPallas:
    def __init__(
        self,
        sample_rate=24000,
        fft_size=2048,
        hop_size=120,
        f0_floor=100,
        f0_ceil=840,
        n_mels=80,
        fmin=0,
        fmax=None,
        power=False,
        elim_0th=True,
    ):
        assert fft_size > 3.0 * sample_rate / f0_floor
        self.sample_rate = sample_rate
        self.fft_size = fft_size
        self.hop_size = hop_size
        self.win_length = fft_size
        self.f0_floor = f0_floor
        self.f0_ceil = f0_ceil
        self.n_mels = n_mels
        self.fmin = fmin
        self.fmax = fmax if fmax is not None else sample_rate / 2
        self.power = power
        self.elim_0th = elim_0th

        self.window = jnp.asarray(hann_window(self.win_length))

        # Mel basis: (K, n_mels) -> zero-pad to (K, M_pad) once in numpy, ship bf16
        # so the MXU gets bf16 x bf16 operands and the resident buffer stays small.
        mel = librosa_mel(sample_rate, fft_size, n_mels, fmin, self.fmax).T  # (K, M)
        m_pad = _round_up(n_mels, 128)
        mel_p = np.zeros((mel.shape[0], m_pad), dtype=np.float32)
        mel_p[:, :n_mels] = mel
        self.melmat_padded = jnp.asarray(mel_p, dtype=jnp.bfloat16)

        wtab, smtab, cptab = cheaptrick_tables(
            sample_rate, fft_size, f0_floor, f0_ceil, q1=-0.15
        )
        self.ct_window = jnp.asarray(wtab)
        self.ct_smooth = jnp.asarray(smtab)
        self.ct_comp = jnp.asarray(cptab)

    def __call__(self, s, y, f):
        # s: (B, 1, T) predicted source, y: (B, 1, T) ground truth, f: (B, 1, T//hop)
        s = s[:, 0, :].astype(jnp.float32)
        y = y[:, 0, :].astype(jnp.float32)
        f = f[:, 0, :].astype(jnp.float32)

        # Frame counts are known statically: generate exactly minlen frames in
        # every producer so no slice-copy pass over the spectra is needed.
        T = y.shape[-1]
        n_stft = 1 + T // self.hop_size
        minlen = min(int(f.shape[-1]), int(n_stft))

        # --- no_grad section (glue, FFT-based) ------------------------------
        e = cheaptrick(
            y,
            f[:, :minlen],
            sample_rate=self.sample_rate,
            hop_size=self.hop_size,
            fft_size=self.fft_size,
            f0_floor=self.f0_floor,
            f0_ceil=self.f0_ceil,
            window_table=self.ct_window,
            smoothing_lifter=self.ct_smooth,
            compensation_lifter=self.ct_comp,
            power=self.power,
            elim_0th=self.elim_0th,
        )                                                   # (B, minlen, K) f32
        y_spec = stft_spec(
            y, self.fft_size, self.hop_size, self.win_length, self.window,
            self.power, n_frames=minlen, out_dtype=jnp.bfloat16,
        )                                                   # (B, minlen, K) bf16
        s_spec = stft_spec(
            s, self.fft_size, self.hop_size, self.win_length, self.window,
            self.power, n_frames=minlen, out_dtype=jnp.bfloat16,
        )                                                   # (B, minlen, K) bf16

        # torch.no_grad() / t.detach() semantics: no gradient through e, y branch.
        e = jax.lax.stop_gradient(e)
        y_spec = jax.lax.stop_gradient(y_spec)

        # --- Pallas hot path -------------------------------------------------
        return residual_loss_pallas(
            y_spec, e, s_spec, self.melmat_padded, self.n_mels, self.elim_0th
        )


# -----------------------------------------------------------------------------
# Demo
# -----------------------------------------------------------------------------
if __name__ == "__main__":
    # Small but self-consistent hyper-parameters (fft_size > 3*sr/f0_floor).
    SR, FFT, HOP = 2400, 256, 30
    F0_FLOOR, F0_CEIL = 100, 300
    N_MELS = 16
    B, N_FRAMES = 2, 8
    T = N_FRAMES * HOP  # 240 samples

    loss_mod = ResidualLossPallas(
        sample_rate=SR,
        fft_size=FFT,
        hop_size=HOP,
        f0_floor=F0_FLOOR,
        f0_ceil=F0_CEIL,
        n_mels=N_MELS,
        fmin=0,
        fmax=None,
        power=False,
        elim_0th=True,
    )

    key = jax.random.PRNGKey(0)
    k1, k2, k3 = jax.random.split(key, 3)
    s = 0.1 * jax.random.normal(k1, (B, 1, T), jnp.float32)   # predicted source
    y = 0.1 * jax.random.normal(k2, (B, 1, T), jnp.float32)   # ground truth
    f = jax.random.uniform(k3, (B, 1, N_FRAMES), jnp.float32, minval=120.0, maxval=280.0)
    f = f.at[:, :, 0].set(0.0)  # a couple of unvoiced frames

    loss = loss_mod(s, y, f)
    loss = jax.block_until_ready(loss)
    assert bool(jnp.isfinite(loss))
    print("KERNEL_OK")
</pallas_src>

<mosaic_0001>
module attributes {stable_mosaic.version = 11 : i64} {
  func.func @_residual_loss_kernel(%arg0: i32, %arg1: memref<16x129xbf16, #tpu.memory_space<vmem>>, %arg2: memref<16x129xf32, #tpu.memory_space<vmem>>, %arg3: memref<16x129xbf16, #tpu.memory_space<vmem>>, %arg4: memref<129x128xbf16, #tpu.memory_space<vmem>>, %arg5: memref<1x1x128xf32, #tpu.memory_space<vmem>>) attributes {dimension_semantics = [#tpu.dimension_semantics<parallel>], iteration_bounds = array<i64: 1>, scalar_prefetch = 0 : i64, scratch_operands = 0 : i64, tpu.core_type = #tpu.core_type<tc>, window_params = [{transform_indices = @transform_0, window_bounds = array<i64: 16, 129>}, {transform_indices = @transform_1, window_bounds = array<i64: 16, 129>}, {transform_indices = @transform_2, window_bounds = array<i64: 16, 129>}, {pipeline_mode = #tpu.pipeline_mode<synchronous>, transform_indices = @transform_3, window_bounds = array<i64: 129, 128>}, {transform_indices = @transform_4, window_bounds = array<i64: 1, 1, 128>}]} {
    %c0 = arith.constant 0 : index
    %c0_0 = arith.constant 0 : index
    %0 = vector.load %arg1[%c0, %c0_0] : memref<16x129xbf16, #tpu.memory_space<vmem>>, vector<16x129xbf16>
    %1 = arith.extf %0 : vector<16x129xbf16> to vector<16x129xf32>
    %c0_1 = arith.constant 0 : index
    %c0_2 = arith.constant 0 : index
    %2 = vector.load %arg2[%c0_1, %c0_2] : memref<16x129xf32, #tpu.memory_space<vmem>>, vector<16x129xf32>
    %c0_3 = arith.constant 0 : index
    %c0_4 = arith.constant 0 : index
    %3 = vector.load %arg3[%c0_3, %c0_4] : memref<16x129xbf16, #tpu.memory_space<vmem>>, vector<16x129xbf16>
    %c0_5 = arith.constant 0 : index
    %c0_6 = arith.constant 0 : index
    %4 = vector.load %arg4[%c0_5, %c0_6] : memref<129x128xbf16, #tpu.memory_space<vmem>>, vector<129x128xbf16>
    %cst = arith.constant 0.000000e+00 : f32
    %5 = vector.broadcast %cst : f32 to vector<16x129xf32>
    %6 = arith.subf %5, %2 : vector<16x129xf32>
    %7 = math.exp %6 : vector<16x129xf32>
    %8 = arith.mulf %1, %7 : vector<16x129xf32>
    %cst_7 = arith.constant dense<0.000000e+00> : vector<16xf32>
    %9 = vector.multi_reduction <add>, %1, %cst_7 [1] : vector<16x129xf32> to vector<16xf32>
    %10 = vector.shape_cast %9 : vector<16xf32> to vector<16x1xf32>
    %cst_8 = arith.constant 0.00775193795 : f32
    %11 = vector.broadcast %cst_8 : f32 to vector<16x1xf32>
    %12 = arith.mulf %10, %11 : vector<16x1xf32>
    %cst_9 = arith.constant dense<0.000000e+00> : vector<16xf32>
    %13 = vector.multi_reduction <add>, %8, %cst_9 [1] : vector<16x129xf32> to vector<16xf32>
    %14 = vector.shape_cast %13 : vector<16xf32> to vector<16x1xf32>
    %cst_10 = arith.constant 0.00775193795 : f32
    %15 = vector.broadcast %cst_10 : f32 to vector<16x1xf32>
    %16 = arith.mulf %14, %15 : vector<16x1xf32>
    %17 = tpu.reciprocal %16 {approx = true} : vector<16x1xf32> -> vector<16x1xf32>
    %18 = arith.mulf %12, %17 : vector<16x1xf32>
    %19 = vector.broadcast %18 : vector<16x1xf32> to vector<16x129xf32>
    %20 = arith.mulf %19, %8 : vector<16x129xf32>
    %21 = arith.truncf %20 : vector<16x129xf32> to vector<16x129xbf16>
    %22 = tpu.concatenate %21, %3 in 0 : vector<16x129xbf16>, vector<16x129xbf16> -> vector<32x129xbf16>
    %cst_11 = arith.constant dense<0.000000e+00> : vector<32x128xf32>
    %23 = tpu.matmul %22, %4, %cst_11 {dimension_numbers = #tpu.dot_dimension_numbers<[1], [0], [0], [1], [0, 0, 1, 1], [], []>} : vector<32x129xbf16>, vector<129x128xbf16>, vector<32x128xf32> -> vector<32x128xf32>
    %cst_12 = arith.constant 1.000000e-07 : f32
    %24 = vector.broadcast %cst_12 : f32 to vector<32x128xf32>
    %25 = arith.maximumf %23, %24 : vector<32x128xf32>
    %26 = math.log %25 : vector<32x128xf32>
    %27 = vector.extract_strided_slice %26 {offsets = [0, 0], sizes = [16, 128], strides = [1, 1]} : vector<32x128xf32> to vector<16x128xf32>
    %28 = vector.extract_strided_slice %26 {offsets = [16, 0], sizes = [16, 128], strides = [1, 1]} : vector<32x128xf32> to vector<16x128xf32>
    %29 = arith.subf %28, %27 : vector<16x128xf32>
    %30 = math.absf %29 : vector<16x128xf32>
    %c0_i32 = arith.constant 0 : i32
    %31 = arith.cmpi slt, %arg0, %c0_i32 : i32
    %32 = arith.extui %31 : i1 to i32
    %c0_i32_13 = arith.constant 0 : i32
    %33 = arith.cmpi ne, %32, %c0_i32_13 : i32
    scf.if %33 {
      %cst_16 = arith.constant dense<0.000000e+00> : vector<128xf32>
      %37 = vector.multi_reduction <add>, %30, %cst_16 [0] : vector<16x128xf32> to vector<128xf32>
      %38 = vector.shape_cast %37 : vector<128xf32> to vector<1x128xf32>
      %c0_17 = arith.constant 0 : index
      %c0_18 = arith.constant 0 : index
      %c0_19 = arith.constant 0 : index
      %39 = vector.load %arg5[%c0_17, %c0_18, %c0_19] : memref<1x1x128xf32, #tpu.memory_space<vmem>>, vector<1x1x128xf32>
      %40 = vector.shape_cast %39 : vector<1x1x128xf32> to vector<1x128xf32>
      %41 = vector.shape_cast %38 : vector<1x128xf32> to vector<1x1x128xf32>
      tpu.vector_store %arg5[%c0_17, %c0_18, %c0_19], %41 {strides = array<i32>} : memref<1x1x128xf32, #tpu.memory_space<vmem>>, vector<1x1x128xf32>,
    } else {
    }
    %c0_i32_14 = arith.constant 0 : i32
    %34 = arith.cmpi eq, %arg0, %c0_i32_14 : i32
    %35 = arith.extui %34 : i1 to i32
    %c0_i32_15 = arith.constant 0 : i32
    %36 = arith.cmpi ne, %35, %c0_i32_15 : i32
    scf.if %36 {
      %37 = tpu.iota {dimensions = array<i32: 0>} : vector<16x128xi32>
      %c16_i32 = arith.constant 16 : i32
      %38 = arith.muli %arg0, %c16_i32 : i32
      %39 = vector.broadcast %38 : i32 to vector<16x128xi32>
      %40 = arith.addi %37, %39 : vector<16x128xi32>
      %c16_i32_16 = arith.constant 16 : i32
      %41 = vector.broadcast %c16_i32_16 : i32 to vector<16x128xi32>
      %42 = arith.cmpi slt, %40, %41 : vector<16x128xi32>
      %cst_17 = arith.constant 0.000000e+00 : f32
      %43 = vector.broadcast %cst_17 : f32 to vector<16x128xf32>
      %44 = arith.select %42, %30, %43 : vector<16x128xi1>, vector<16x128xf32>
      %cst_18 = arith.constant dense<0.000000e+00> : vector<128xf32>
      %45 = vector.multi_reduction <add>, %44, %cst_18 [0] : vector<16x128xf32> to vector<128xf32>
      %46 = vector.shape_cast %45 : vector<128xf32> to vector<1x128xf32>
      %c0_19 = arith.constant 0 : index
      %c0_20 = arith.constant 0 : index
      %c0_21 = arith.constant 0 : index
      %47 = vector.load %arg5[%c0_19, %c0_20, %c0_21] : memref<1x1x128xf32, #tpu.memory_space<vmem>>, vector<1x1x128xf32>
      %48 = vector.shape_cast %47 : vector<1x1x128xf32> to vector<1x128xf32>
      %49 = vector.shape_cast %46 : vector<1x128xf32> to vector<1x1x128xf32>
      tpu.vector_store %arg5[%c0_19, %c0_20, %c0_21], %49 {strides = array<i32>} : memref<1x1x128xf32, #tpu.memory_space<vmem>>, vector<1x1x128xf32>,
    } else {
    }
    return
  }
  func.func @transform_0(%arg0: i32) -> (i32, i32) {
    %c0_i32 = arith.constant 0 : i32
    %c0_i32_0 = arith.constant 0 : i32
    return %arg0, %c0_i32 : i32, i32
  }
  func.func @transform_1(%arg0: i32) -> (i32, i32) {
    %c0_i32 = arith.constant 0 : i32
    %c0_i32_0 = arith.constant 0 : i32
    return %arg0, %c0_i32 : i32, i32
  }
  func.func @transform_2(%arg0: i32) -> (i32, i32) {
    %c0_i32 = arith.constant 0 : i32
    %c0_i32_0 = arith.constant 0 : i32
    return %arg0, %c0_i32 : i32, i32
  }
  func.func @transform_3(%arg0: i32) -> (i32, i32) {
    %c0_i32 = arith.constant 0 : i32
    %c0_i32_0 = arith.constant 0 : i32
    %c0_i32_1 = arith.constant 0 : i32
    return %c0_i32, %c0_i32_0 : i32, i32
  }
  func.func @transform_4(%arg0: i32) -> (i32, i32, i32) {
    %c0_i32 = arith.constant 0 : i32
    %c0_i32_0 = arith.constant 0 : i32
    %c0_i32_1 = arith.constant 0 : i32
    return %arg0, %c0_i32, %c0_i32_0 : i32, i32, i32
  }
}

</mosaic_0001>

<llo_original>
// kernel: tpu_custom_call.1
$region0: #{tpu_custom_call.1}
  #allocation0 [shape = 'u32[]', space=smem, size = 0x4, offset = 0x4, fixed_abs, tag = 'smem constant byte address 0x4 - core index']
  #allocation1 [shape = 'u32[144,128]{1,0:T(1,128)}', space=vmem, size = 0x12000, scoped, tag = 'internal scratch']
  %s0 = inlined_call_operand.hbm [shape: bf16[16,129], index: 0, kind: input, shape index: {}]
  %s1 = inlined_call_operand.hbm [shape: f32[16,129], index: 1, kind: input, shape index: {}]
  %s2 = inlined_call_operand.hbm [shape: bf16[16,129], index: 2, kind: input, shape index: {}]
  %s3 = inlined_call_operand.hbm [shape: bf16[129,128], index: 3, kind: input, shape index: {}]
  %s4 = inlined_call_operand.hbm [shape: f32[1,1,128], index: 4, kind: output, shape index: {}]
  %s5 = sld [smem:[#allocation0]]
  $region50: #{tpu_custom_call.1} parent=0
    _
  %s7 = ssub.s32 1, %s5
  %s8 = scalar_select 0, %s7, %s5
  $region1: #{tpu_custom_call.1} parent=0
    #allocation2 [shape = 'u8[8192]{0}', space=vmem, size = 0x2000, scoped, tag = 'input window, operand 0, single buffered']
    #allocation3 [shape = 's32[1]{0}', space=sflag, size = 0x4, scoped, tag = 'scoped memory for tpu_custom_call.1']
    #allocation4 [shape = 's32[1]{0}', space=sflag, size = 0x4, scoped, tag = 'scoped memory for tpu_custom_call.1']
    #allocation5 [shape = 'u8[16384]{0}', space=vmem, size = 0x4000, scoped, tag = 'input window, operand 1, single buffered']
    #allocation6 [shape = 's32[1]{0}', space=sflag, size = 0x4, scoped, tag = 'scoped memory for tpu_custom_call.1']
    #allocation7 [shape = 'u8[8192]{0}', space=vmem, size = 0x2000, scoped, tag = 'input window, operand 2, single buffered']
    #allocation8 [shape = 'u8[34816]{0}', space=vmem, size = 0x8800, scoped, tag = 'input window, operand 3, single buffered']
    #allocation9 [shape = 's32[1]{0}', space=sflag, size = 0x4, scoped, tag = 'scoped memory for tpu_custom_call.1']
    #allocation10 [shape = 'u8[512]{0}', space=vmem, size = 0x400, scoped, tag = 'output window, operand 0, single buffered']
    %9 = vsyncpa [#allocation3], 0
    %10 = vsyncpa [#allocation6], 0
    %11 = vsyncpa [#allocation9], 0
    %12 = vsyncpa [#allocation4], 0
    // Predicated region
    $region2: #{tpu_custom_call.1} parent=1 // pred_check
      _
    $region3: #{tpu_custom_call.1} parent=1 // pred_check_branch
      %14 = sbr.rel (0) target = $region5
    $region4: #{tpu_custom_call.1} parent=1 // pred_region
      %s16 = ssub.s32 256, 256
      %17 = vsyncadd [#allocation3], %s16
      %s18 = sshll.u32 [#allocation2], 4
      %s19 = int_to_ptr.vmem [resolvable:$true] %s18
      %24 = dma.hbm_to_vmem [thread:$0]  %s0, 256, %s19, [#allocation3], 128, 128, 8
    $region5: #{tpu_custom_call.1} parent=1 // pred_fallthru
      _
    // Predicated region
    $region6: #{tpu_custom_call.1} parent=1 // pred_check
      _
    $region7: #{tpu_custom_call.1} parent=1 // pred_check_branch
      %26 = sbr.rel (0) target = $region9
    $region8: #{tpu_custom_call.1} parent=1 // pred_region
      %s28 = ssub.s32 512, 512
      %29 = vsyncadd [#allocation6], %s28
      %s30 = sshll.u32 [#allocation5], 4
      %s31 = int_to_ptr.vmem [resolvable:$true] %s30
      %36 = dma.hbm_to_vmem [thread:$0]  %s1, 512, %s31, [#allocation6], 256, 256, 16
    $region9: #{tpu_custom_call.1} parent=1 // pred_fallthru
      _
    // Predicated region
    $region10: #{tpu_custom_call.1} parent=1 // pred_check
      _
    $region11: #{tpu_custom_call.1} parent=1 // pred_check_branch
      %38 = sbr.rel (0) target = $region13
    $region12: #{tpu_custom_call.1} parent=1 // pred_region
      %s40 = ssub.s32 256, 256
      %41 = vsyncadd [#allocation6], %s40
      %s42 = sshll.u32 [#allocation7], 4
      %s43 = int_to_ptr.vmem [resolvable:$true] %s42
      %48 = dma.hbm_to_vmem [thread:$0]  %s2, 256, %s43, [#allocation6], 128, 128, 8
    $region13: #{tpu_custom_call.1} parent=1 // pred_fallthru
      _
    // Predicated region
    $region14: #{tpu_custom_call.1} parent=1 // pred_check
      _
    $region15: #{tpu_custom_call.1} parent=1 // pred_check_branch
      %50 = sbr.rel (0) target = $region17
    $region16: #{tpu_custom_call.1} parent=1 // pred_region
      %s52 = ssub.s32 1088, 1088
      %53 = vsyncadd [#allocation9], %s52
      %s54 = sshll.u32 [#allocation8], 4
      %s55 = int_to_ptr.vmem [resolvable:$true] %s54
      %60 = dma.hbm_to_vmem [thread:$0]  %s3, 1088, %s55, [#allocation9], 64, 64, 4
    $region17: #{tpu_custom_call.1} parent=1 // pred_fallthru
      _
    // Predicated region
    $region18: #{tpu_custom_call.1} parent=1 // pred_check
      _
    $region19: #{tpu_custom_call.1} parent=1 // pred_check_branch
      %62 = sbr.rel (0) target = $region21
    $region20: #{tpu_custom_call.1} parent=1 // pred_region
      %63 = dma.done [#allocation3], 256
    $region21: #{tpu_custom_call.1} parent=1 // pred_fallthru
      _
    // Predicated region
    $region22: #{tpu_custom_call.1} parent=1 // pred_check
      _
    $region23: #{tpu_custom_call.1} parent=1 // pred_check_branch
      %65 = sbr.rel (0) target = $region25
    $region24: #{tpu_custom_call.1} parent=1 // pred_region
      %66 = dma.done [#allocation6], 512
    $region25: #{tpu_custom_call.1} parent=1 // pred_fallthru
      _
    // Predicated region
    $region26: #{tpu_custom_call.1} parent=1 // pred_check
      _
    $region27: #{tpu_custom_call.1} parent=1 // pred_check_branch
      %68 = sbr.rel (0) target = $region29
    $region28: #{tpu_custom_call.1} parent=1 // pred_region
      %69 = dma.done [#allocation6], 256
    $region29: #{tpu_custom_call.1} parent=1 // pred_fallthru
      _
    // Predicated region
    $region30: #{tpu_custom_call.1} parent=1 // pred_check
      _
    $region31: #{tpu_custom_call.1} parent=1 // pred_check_branch
      %71 = sbr.rel (0) target = $region33
    $region32: #{tpu_custom_call.1} parent=1 // pred_region
      %72 = dma.done [#allocation9], 1088
    $region33: #{tpu_custom_call.1} parent=1 // pred_fallthru
      _
    %v74 = vld [vmem:[#allocation2] sm:$0xff]
    %v75 = vld [vmem:[#allocation2 + $0x8] sm:$0xff]
    %v76 = vunpack.c.l.bf16 %v74
    %v77 = vunpack.c.h.bf16 %v74
    %v78 = vunpack.c.l.bf16 %v75
    %v79 = vunpack.c.h.bf16 %v75
    %v80 = vld [vmem:[#allocation5] sm:$0xff]
    %v81 = vld [vmem:[#allocation5 + $0x8] sm:$0xff]
    %v82 = vld [vmem:[#allocation5 + $0x10] sm:$0xff]
    %v83 = vld [vmem:[#allocation5 + $0x18] sm:$0xff]
    %v84 = vld [vmem:[#allocation7] sm:$0xff]
    %v85 = vld [vmem:[#allocation7 + $0x8] sm:$0xff]
    %v86 = vld [vmem:[#allocation8] sm:$0xf]
    %v87 = vld [vmem:[#allocation8 + $0x4] sm:$0xf]
    %v88 = vld [vmem:[#allocation8 + $0x8] sm:$0xf]
    %v89 = vld [vmem:[#allocation8 + $0xc] sm:$0xf]
    %v90 = vld [vmem:[#allocation8 + $0x10] sm:$0xf]
    %v91 = vld [vmem:[#allocation8 + $0x14] sm:$0xf]
    %v92 = vld [vmem:[#allocation8 + $0x18] sm:$0xf]
    %v93 = vld [vmem:[#allocation8 + $0x1c] sm:$0xf]
    %v94 = vld [vmem:[#allocation8 + $0x20] sm:$0xf]
    %v95 = vld [vmem:[#allocation8 + $0x24] sm:$0xf]
    %v96 = vld [vmem:[#allocation8 + $0x28] sm:$0xf]
    %v97 = vld [vmem:[#allocation8 + $0x2c] sm:$0xf]
    %v98 = vld [vmem:[#allocation8 + $0x30] sm:$0xf]
    %v99 = vld [vmem:[#allocation8 + $0x34] sm:$0xf]
    %v100 = vld [vmem:[#allocation8 + $0x38] sm:$0xf]
    %v101 = vld [vmem:[#allocation8 + $0x3c] sm:$0xf]
    %v102 = vld [vmem:[#allocation8 + $0x40] sm:$0x1]
    %v103 = vsub.f32 0.0, %v80
    %v104 = vsub.f32 0.0, %v81
    %v105 = vsub.f32 0.0, %v82
    %v106 = vsub.f32 0.0, %v83
    %v107 = vmul.f32 %v103, 1.442695
    %v108 = vpow.pop %v107
    %v109 = vmul.f32 %v104, 1.442695
    %v110 = vpow.pop %v109
    %v111 = vmul.f32 %v105, 1.442695
    %v112 = vpow.pop %v111
    %v113 = vmul.f32 %v106, 1.442695
    %v114 = vpow.pop %v113
    %v115 = vmul.f32 %v76, %v108
    %v116 = vmul.f32 %v77, %v110
    %v117 = vmul.f32 %v78, %v112
    %v118 = vmul.f32 %v79, %v114
    %vm119 = vcmask 7168
    %v120 = vsel %vm119, %v77, 0.0
    %v121 = vadd.f32 %v76, %v120
    %122 = vadd.xlane.f32.xlu0 %v121
    %v123 = vpop.xlane.xlu0 %122
    %v124 = vsel %vm119, %v79, 0.0
    %v125 = vadd.f32 %v78, %v124
    %126 = vadd.xlane.f32.xlu0 %v125
    %v127 = vpop.xlane.xlu0 %126
    %v128 = vmul.f32 %v123, 0.007751938
    %v129 = vmul.f32 %v127, 0.007751938
    %v130 = vsel %vm119, %v116, 0.0
    %v131 = vadd.f32 %v115, %v130
    %132 = vadd.xlane.f32.xlu0 %v131
    %v133 = vpop.xlane.xlu0 %132
    %v134 = vsel %vm119, %v118, 0.0
    %v135 = vadd.f32 %v117, %v134
    %136 = vadd.xlane.f32.xlu0 %v135
    %v137 = vpop.xlane.xlu0 %136
    %v138 = vmul.f32 %v133, 0.007751938
    %v139 = vmul.f32 %v137, 0.007751938
    %v140 = vrcp.pop %v138
    %v141 = vrcp.pop %v139
    %v142 = vmul.f32 %v128, %v140
    %v143 = vmul.f32 %v129, %v141
    %v144 = vmul.f32 %v142, %v115
    %v145 = vmul.f32 %v142, %v116
    %v146 = vmul.f32 %v143, %v117
    %v147 = vmul.f32 %v143, %v118
    %v148 = vpack.c.bf16 %v146, %v144
    %v149 = vpack.c.bf16 %v147, %v145
    %v152 = vunpack.c.l.b16 %v84
    %v153 = vunpack.c.h.b16 %v84
    %v154 = vunpack.c.l.b16 %v85
    %v155 = vunpack.c.h.b16 %v85
    %v156 = vpack.c.b16 %v154, %v152
    %v157 = vpack.c.b16 %v155, %v153
    %v176 = vunpack.c.l.b16 %v86
    %v177 = vunpack.c.l.b16 %v87
    %v178 = vunpack.c.l.b16 %v88
    %v179 = vunpack.c.l.b16 %v89
    %v180 = vunpack.c.l.b16 %v90
    %v181 = vunpack.c.l.b16 %v91
    %v182 = vunpack.c.l.b16 %v92
    %v183 = vunpack.c.l.b16 %v93
    %v184 = vunpack.c.l.b16 %v94
    %v185 = vunpack.c.l.b16 %v95
    %v186 = vunpack.c.l.b16 %v96
    %v187 = vunpack.c.l.b16 %v97
    %v188 = vunpack.c.l.b16 %v98
    %v189 = vunpack.c.l.b16 %v99
    %v190 = vunpack.c.l.b16 %v100
    %v191 = vunpack.c.l.b16 %v101
    %v192 = vunpack.c.l.b16 %v102
    %v193 = vpack.c.b16 %v177, %v176
    %v194 = vpack.c.b16 %v179, %v178
    %v195 = vpack.c.b16 %v181, %v180
    %v196 = vpack.c.b16 %v183, %v182
    %v197 = vpack.c.b16 %v185, %v184
    %v198 = vpack.c.b16 %v187, %v186
    %v199 = vpack.c.b16 %v189, %v188
    %v200 = vpack.c.b16 %v191, %v190
    %v201 = vpack.c.b16 %v192, %v192
    %v211 = vsel %vm119, %v149, 0
    %v214 = vsel %vm119, %v157, 0
    %vm216 = vcmask 1040384
    %v217 = vsel 0, 4294967295, 65535
    %v218 = vsel %vm216, %v217, 0
    %v220 = vand.u32 %v201, %v218
    %222 = vmatprep.subr.bf16.mxu0 0
    %223 = vmatpush1.bf16.msra.mxu0 %v193
    %224 = vmatprep.subr.bf16.mxu0 0
    %225 = vmatpush1.bf16.msra.mxu0 %v194
    %226 = vmatprep.subr.bf16.mxu0 0
    %227 = vmatpush1.bf16.msra.mxu0 %v195
    %228 = vmatprep.subr.bf16.mxu0 0
    %229 = vmatpush1.bf16.msra.mxu0 %v196
    %230 = vmatprep.subr.bf16.mxu0 0
    %231 = vmatpush1.bf16.msra.mxu0 %v197
    %232 = vmatprep.subr.bf16.mxu0 0
    %233 = vmatpush1.bf16.msra.mxu0 %v198
    %234 = vmatprep.subr.bf16.mxu0 0
    %235 = vmatpush1.bf16.msra.mxu0 %v199
    %236 = vmatprep.subr.bf16.mxu0 0
    %237 = vmatpush1.bf16.msra.mxu0 %v200
    %238 = vmatprep.subr.bf16.mxu0 0
    %239 = vmatpush1.bf16.msra.mxu0 %v220
    %240 = vmatprep.subr.bf16.mxu0 0
    %241 = vmatpush1.bf16.msra.mxu0 0
    %242 = vmatprep.subr.bf16.mxu0 0
    %243 = vmatpush1.bf16.msra.mxu0 0
    %244 = vmatprep.subr.bf16.mxu0 0
    %245 = vmatpush1.bf16.msra.mxu0 0
    %246 = vmatprep.subr.bf16.mxu0 0
    %247 = vmatpush1.bf16.msra.mxu0 0
    %248 = vmatprep.subr.bf16.mxu0 0
    %249 = vmatpush1.bf16.msra.mxu0 0
    %250 = vmatprep.subr.bf16.mxu0 0
    %251 = vmatpush1.bf16.msra.mxu0 0
    %252 = vmatprep.subr.bf16.mxu0 0
    %253 = vmatpush1.bf16.msra.mxu0 0
    %254 = vmatprep.mubr.bf16.mxu0 %v211
    %255 = vmatmul.mubr.bf16.gmra.mrb[0].mxu0 %v148
    %v256 = vpop.f32.mrb[0].mxu0
    %v257 = vadd.f32 0.0, %v256
    %v258 = vpop.f32.mrb[0].mxu0
    %v259 = vpop.f32.mrb[0].mxu0
    %v260 = vadd.f32 0.0, %v259
    %v261 = vpop.f32.mrb[0].mxu0
    %262 = vmatprep.mubr.bf16.mxu0 %v214
    %263 = vmatmul.mubr.bf16.gmra.mrb[0].mxu0 %v156
    %v264 = vpop.f32.mrb[0].mxu0
    %v265 = vadd.f32 0.0, %v264
    %v266 = vpop.f32.mrb[0].mxu0
    %v267 = vpop.f32.mrb[0].mxu0
    %v268 = vadd.f32 0.0, %v267
    %v269 = vpop.f32.mrb[0].mxu0
    %270 = vdwg.mxu0
    %v271 = vmax.f32 %v257, 1e-07
    %v272 = vmax.f32 %v260, 1e-07
    %v273 = vmax.f32 %v265, 1e-07
    %v274 = vmax.f32 %v268, 1e-07
    %v275 = vlog2.pop %v271
    %v276 = vmul.f32 %v275, 0.6931472
    %v277 = vlog2.pop %v272
    %v278 = vmul.f32 %v277, 0.6931472
    %v279 = vlog2.pop %v273
    %v280 = vmul.f32 %v279, 0.6931472
    %v281 = vlog2.pop %v274
    %v282 = vmul.f32 %v281, 0.6931472
    %v283 = vsub.f32 %v280, %v276
    %v284 = vsub.f32 %v282, %v278
    %v285 = vand.u32 2147483647, %v283
    %v286 = vand.u32 2147483647, %v284
    %p287 = scmp.lt.s32.totalorder 0, 0
    // Predicated region
    $region34: #{tpu_custom_call.1} parent=1 // pred_check
      %p288 = pneg %p287
    $region35: #{tpu_custom_call.1} parent=1 // pred_check_branch
      %290 = sbr.rel (%p288) target = $region37
    $region36: #{tpu_custom_call.1} parent=1 // pred_region
      %v291 = vadd.f32 %v285, %v286
      %v292 = vrot.slane %v291, 4
      %v293 = vadd.f32 %v291, %v292
      %v294 = vrot.slane %v293, 2
      %v295 = vadd.f32 %v293, %v294
      %v296 = vrot.slane %v295, 1
      %v297 = vadd.f32 %v295, %v296
      %298 = vst [vmem:[#allocation10] sm:$0x1] %v297
    $region37: #{tpu_custom_call.1} parent=1 // pred_fallthru
      _
    %p299 = scmp.eq.s32.totalorder 0, 0
    // Predicated region
    $region38: #{tpu_custom_call.1} parent=1 // pred_check
      %p300 = pneg %p299
    $region39: #{tpu_custom_call.1} parent=1 // pred_check_branch
      %302 = sbr.rel (%p300) target = $region41
    $region40: #{tpu_custom_call.1} parent=1 // pred_region
      %v303 = vlaneseq
      %v304 = vshrl.u32 %v303, 7
      %v305 = vadd.s32 %v304, 8
      %s306 = smul.u32 0, 16
      %v307 = vstv %s306
      %v308 = vadd.s32 %v304, %v307
      %v309 = vadd.s32 %v305, %v307
      %vm310 = vcmp.lt.s32.totalorder %v308, 16
      %vm311 = vcmp.lt.s32.totalorder %v309, 16
      %v312 = vsel %vm310, %v285, 0.0
      %v313 = vsel %vm311, %v286, 0.0
      %v314 = vadd.f32 %v312, %v313
      %v315 = vrot.slane %v314, 4
      %v316 = vadd.f32 %v314, %v315
      %v317 = vrot.slane %v316, 2
      %v318 = vadd.f32 %v316, %v317
      %v319 = vrot.slane %v318, 1
      %v320 = vadd.f32 %v318, %v319
      %321 = vst [vmem:[#allocation10] sm:$0x1] %v320
    $region41: #{tpu_custom_call.1} parent=1 // pred_fallthru
      _
    // Predicated region
    $region42: #{tpu_custom_call.1} parent=1 // pred_check
      _
    $region43: #{tpu_custom_call.1} parent=1 // pred_check_branch
      %323 = sbr.rel (0) target = $region45
    $region44: #{tpu_custom_call.1} parent=1 // pred_region
      %s325 = ssub.s32 16, 16
      %326 = vsyncadd [#allocation4], %s325
      %s328 = sshll.u32 [#allocation10], 4
      %s329 = int_to_ptr.vmem [resolvable:$true] %s328
      %331 = dma.vmem_to_hbm [thread:$0]  %s329, 16, %s4, [#allocation4]
    $region45: #{tpu_custom_call.1} parent=1 // pred_fallthru
      _
    // Predicated region
    $region46: #{tpu_custom_call.1} parent=1 // pred_check
      _
    $region47: #{tpu_custom_call.1} parent=1 // pred_check_branch
      %333 = sbr.rel (0) target = $region49
    $region48: #{tpu_custom_call.1} parent=1 // pred_region
      %334 = dma.done [#allocation4], 16
    $region49: #{tpu_custom_call.1} parent=1 // pred_fallthru
      _
    %335 = vsyncpa [#allocation3], 1
    %336 = vsyncpa [#allocation6], 1
    %337 = vsyncpa [#allocation9], 1
    %338 = vsyncpa [#allocation4], 1

</llo_original>
